<compile_context>
chip_gen: v5e
topology: v5e:2x2
jax: 0.10.0
libtpu: 0.0.40
codegen_flags: <defaults>
</compile_context>

<pallas_src>
import functools

import jax
import jax.numpy as jnp
from jax.experimental import pallas as pl
from jax.experimental.pallas import tpu as pltpu


def _shuffle_kernel(x_ref, o_ref):
    # x_ref: (G, ct, ht)  -- ct contiguous input channels for each of G groups
    # o_ref: (ct, G, ht)  -- shuffled destination slab
    G, ct, _ = x_ref.shape
    # Static unrolled loop over the smaller axis; each statement is a dense
    # load + strided (or dense) store entirely inside VMEM.
    if G <= ct:
        for g in range(G):
            o_ref[:, g, :] = x_ref[g]
    else:
        for j in range(ct):
            o_ref[j] = x_ref[:, j, :]


def _vmem_budgets():
    """(per-step block budget, vmem_limit cap) gated on the chip's VMEM size."""
    try:
        cap = int(getattr(pltpu.get_tpu_info(), "vmem_capacity_bytes", 128 << 20))
    except Exception:  # pragma: no cover - conservative fallback
        cap = 128 << 20
    if cap <= (64 << 20):            # v7x: 64 MiB VMEM per TensorCore
        return 24 << 20, 44 << 20
    return 32 << 20, 96 << 20        # v5e / v6e: 128 MiB VMEM


def _pick_tiles(G, cpg, hw, itemsize, budget):
    """Pick (ct, ht): channel-within-group tile and spatial (lane) tile."""
    c = G * cpg

    def step_bytes(ct, ht):
        # input block + output block, each double-buffered by the pipeline.
        return 4 * G * ct * ht * itemsize

    sub = max(8, 32 // itemsize)     # sublane tile: f32 -> 8, bf16 -> 16, i8 -> 32

    # (1) Whole per-batch slab (common case): full-extent last dims, 1 step/batch.
    if step_bytes(cpg, hw) <= budget:
        return cpg, hw

    # (2) Keep all channels, tile hw in multiples of 128 (partial tail is masked
    #     by Pallas; block itself stays 128-aligned so stores stay lane-dense).
    if hw > 128:
        ht = (budget // (4 * c * itemsize)) // 128 * 128
        if ht >= 128:
            return cpg, ht
        ht = 128
    else:
        ht = hw                      # full extent, exempt from the 128 rule

    # (3) Very large channel counts: also tile cpg in multiples of the sublane
    #     tile (or clamp to full extent, which is always legal).
    cand = (budget // (4 * G * ht * itemsize)) // sub * sub
    ct = min(cpg, max(sub, cand))
    return ct, ht


@functools.partial(jax.jit, static_argnames=("groups",))
def permutation_block(x: jax.Array, groups: int) -> jax.Array:
    """Channel shuffle of an NCHW tensor, matching PermutationBlock.forward."""
    n, c, h, w = x.shape
    G = int(groups)
    assert c % G == 0, "channels must be divisible by groups"
    cpg = c // G
    hw = h * w
    itemsize = jnp.dtype(x.dtype).itemsize

    x4 = x.reshape(n, G, cpg, hw)            # free contiguous view

    budget, limit_cap = _vmem_budgets()
    ct, ht = _pick_tiles(G, cpg, hw, itemsize, budget)

    n_ct = pl.cdiv(cpg, ct)
    n_ht = pl.cdiv(hw, ht)

    # v7x has 2 TensorCores sharing HBM: if there is only one grid step, split
    # the spatial axis so both cores get (parallel) work.  No effect on v5e/v6e.
    if n == 1 and n_ct * n_ht == 1 and hw >= 256:
        ht = pl.cdiv(hw, 2 * 128) * 128
        n_ht = pl.cdiv(hw, ht)

    step_bytes = 4 * G * ct * ht * itemsize
    vmem_limit = int(min(max(step_bytes + (4 << 20), 16 << 20), limit_cap))

    out4 = pl.pallas_call(
        _shuffle_kernel,
        out_shape=jax.ShapeDtypeStruct((n, cpg, G, hw), x.dtype),
        grid=(n, n_ct, n_ht),
        in_specs=[
            # (batch squeezed, all G groups, ct channels/group, ht lanes)
            pl.BlockSpec((None, G, ct, ht), lambda i, j, t: (i, 0, j, t)),
        ],
        out_specs=pl.BlockSpec((None, ct, G, ht), lambda i, j, t: (i, j, 0, t)),
        compiler_params=pltpu.CompilerParams(
            dimension_semantics=("parallel", "parallel", "parallel"),
            vmem_limit_bytes=vmem_limit,
        ),
    )(x4)

    # (n, cpg, G, hw) -> (n, c, h, w) is a free contiguous view: channel order
    # (j, g) flattens to j*G + g, exactly the shuffled channel index.
    return out4.reshape(n, c, h, w)


def _reference_channel_shuffle(x: jax.Array, groups: int) -> jax.Array:
    n, c, h, w = x.shape
    return (
        x.reshape(n, groups, c // groups, h, w)
        .transpose(0, 2, 1, 3, 4)
        .reshape(n, c, h, w)
    )


if __name__ == "__main__":
    key = jax.random.PRNGKey(0)

    # Primary test shape (matches the module's expected usage).
    n, c, h, w = 2, 4, 16, 16
    groups = 2
    x = jax.random.normal(key, (n, c, h, w), dtype=jnp.float32)

    out = jax.block_until_ready(permutation_block(x, groups))
    ref = _reference_channel_shuffle(x, groups)
    assert out.shape == (n, c, h, w)
    assert out.dtype == x.dtype
    assert jnp.array_equal(out, ref), "Pallas channel shuffle mismatch vs reference"

    # Secondary check: non-multiple-of-128 spatial size (no padding needed now)
    # and a different group count.
    x2 = jax.random.normal(jax.random.PRNGKey(0), (2, 8, 7, 9), dtype=jnp.float32)
    out2 = jax.block_until_ready(permutation_block(x2, 4))
    ref2 = _reference_channel_shuffle(x2, 4)
    assert jnp.array_equal(out2, ref2), "Pallas channel shuffle mismatch (odd hw)"

    # Tertiary check: bf16 path (different sublane tile).
    x3 = jax.random.normal(jax.random.PRNGKey(0), (1, 16, 14, 14), dtype=jnp.bfloat16)
    out3 = jax.block_until_ready(permutation_block(x3, 2))
    ref3 = _reference_channel_shuffle(x3, 2)
    assert jnp.array_equal(out3, ref3), "Pallas channel shuffle mismatch (bf16)"

    print("KERNEL_OK")
</pallas_src>

<mosaic_0001>
module attributes {stable_mosaic.version = 11 : i64} {
  func.func @_shuffle_kernel(%arg0: i32, %arg1: i32, %arg2: i32, %arg3: memref<1x2x2x256xf32, #tpu.memory_space<vmem>>, %arg4: memref<1x2x2x256xf32, #tpu.memory_space<vmem>>) attributes {dimension_semantics = [#tpu.dimension_semantics<parallel>, #tpu.dimension_semantics<parallel>, #tpu.dimension_semantics<parallel>], iteration_bounds = array<i64: 2, 1, 1>, scalar_prefetch = 0 : i64, scratch_operands = 0 : i64, tpu.core_type = #tpu.core_type<tc>, window_params = [{transform_indices = @transform_0, window_bounds = array<i64: 1, 2, 2, 256>}, {transform_indices = @transform_1, window_bounds = array<i64: 1, 2, 2, 256>}]} {
    %c0 = arith.constant 0 : index
    %c0_0 = arith.constant 0 : index
    %c0_1 = arith.constant 0 : index
    %c0_2 = arith.constant 0 : index
    %0 = vector.load %arg3[%c0, %c0_0, %c0_1, %c0_2] : memref<1x2x2x256xf32, #tpu.memory_space<vmem>>, vector<1x1x2x256xf32>
    %1 = vector.shape_cast %0 : vector<1x1x2x256xf32> to vector<2x256xf32>
    %c0_3 = arith.constant 0 : index
    %c0_4 = arith.constant 0 : index
    %c0_5 = arith.constant 0 : index
    %c0_6 = arith.constant 0 : index
    %2 = vector.load %arg4[%c0_3, %c0_4, %c0_5, %c0_6] : memref<1x2x2x256xf32, #tpu.memory_space<vmem>>, vector<1x2x1x256xf32>
    %3 = vector.shape_cast %2 : vector<1x2x1x256xf32> to vector<2x256xf32>
    %4 = vector.shape_cast %1 : vector<2x256xf32> to vector<1x2x1x256xf32>
    tpu.vector_store %arg4[%c0_3, %c0_4, %c0_5, %c0_6], %4 {strides = array<i32>} : memref<1x2x2x256xf32, #tpu.memory_space<vmem>>, vector<1x2x1x256xf32>,
    %c0_7 = arith.constant 0 : index
    %c1 = arith.constant 1 : index
    %c0_8 = arith.constant 0 : index
    %c0_9 = arith.constant 0 : index
    %5 = vector.load %arg3[%c0_7, %c1, %c0_8, %c0_9] : memref<1x2x2x256xf32, #tpu.memory_space<vmem>>, vector<1x1x2x256xf32>
    %6 = vector.shape_cast %5 : vector<1x1x2x256xf32> to vector<2x256xf32>
    %c0_10 = arith.constant 0 : index
    %c0_11 = arith.constant 0 : index
    %c1_12 = arith.constant 1 : index
    %c0_13 = arith.constant 0 : index
    %7 = vector.load %arg4[%c0_10, %c0_11, %c1_12, %c0_13] : memref<1x2x2x256xf32, #tpu.memory_space<vmem>>, vector<1x2x1x256xf32>
    %8 = vector.shape_cast %7 : vector<1x2x1x256xf32> to vector<2x256xf32>
    %9 = vector.shape_cast %6 : vector<2x256xf32> to vector<1x2x1x256xf32>
    tpu.vector_store %arg4[%c0_10, %c0_11, %c1_12, %c0_13], %9 {strides = array<i32>} : memref<1x2x2x256xf32, #tpu.memory_space<vmem>>, vector<1x2x1x256xf32>,
    return
  }
  func.func @transform_0(%arg0: i32, %arg1: i32, %arg2: i32) -> (i32, i32, i32, i32) {
    %c0_i32 = arith.constant 0 : i32
    %c0_i32_0 = arith.constant 0 : i32
    return %arg0, %c0_i32, %arg1, %arg2 : i32, i32, i32, i32
  }
  func.func @transform_1(%arg0: i32, %arg1: i32, %arg2: i32) -> (i32, i32, i32, i32) {
    %c0_i32 = arith.constant 0 : i32
    %c0_i32_0 = arith.constant 0 : i32
    return %arg0, %arg1, %c0_i32, %arg2 : i32, i32, i32, i32
  }
}

</mosaic_0001>

<llo_original>
// kernel: permutation_block.1
$region0: #{permutation_block.1}
  #allocation0 [shape = 'u32[]', space=smem, size = 0x4, offset = 0x4, fixed_abs, tag = 'smem constant byte address 0x4 - core index']
  #allocation1 [shape = 'u32[72,128]{1,0:T(1,128)}', space=vmem, size = 0x9000, scoped, tag = 'internal scratch']
  %s0 = inlined_call_operand.vmem [shape: f32[2,2,2,256], index: 0, kind: input, shape index: {}]
  %s1 = inlined_call_operand.vmem [shape: f32[2,2,2,256], index: 1, kind: output, shape index: {}]
  %s2 = sld [smem:[#allocation0]]
  $region37: #{permutation_block.1} parent=0
    _
  %s4 = ssub.s32 1, %s2
  %s5 = scalar_select 0, %s4, %s2
  loop: start=0, step=1, limit=4
  $region2: #{permutation_block.1} parent=0 // loop_pre_header
    _
  $region3: #{permutation_block.1} parent=0 // loop_header
    %s7 = sphi 0, %s11
    %p8 = scmp.ge.s32.totalorder %s7, 4
    %s14 = sphi 0, %s33
    %s15 = sphi 0, %s29
    %s16 = sphi 0, %s25
    %s17 = sphi 0, %s14
    %s18 = sphi 0, %s15
    %s19 = sphi 0, %s16
    %s20 = sphi 0, %s17
    %s21 = sphi 0, %s18
    %s22 = sphi 0, %s19
    %s40 = sphi 0, %s42
    %s43 = sphi 0, %s40
    %s44 = sphi 0, %s43
    %s60 = sphi 0, %s44
    %s70 = sphi 0, %s72
    %s73 = sphi 0, %s70
    %s74 = sphi 0, %s73
    %s90 = sphi 0, %s74
  $region4: #{permutation_block.1} parent=0 // loop_header_branch
    %10 = sbr.rel (%p8) target = $region8
  $region5: #{permutation_block.1} parent=0 // loop_body
    %s12 = ssub.s32 %s7, 1
    %s13 = ssub.s32 %s7, 2
    %s23 = sadd.s32 1, %s16
    %p24 = scmp.ge.s32.totalorder %s23, 1
    %s25 = scalar_select %p24, 0, %s23
    %s26 = sadd.s32 1, %s15
    %s27 = scalar_select %p24, %s26, %s15
    %p28 = scmp.ge.s32.totalorder %s27, 1
    %s29 = scalar_select %p28, 0, %s27
    %s30 = sadd.s32 1, %s14
    %s31 = scalar_select %p28, %s30, %s14
    %p32 = scmp.ge.s32.totalorder %s31, 2
    %s33 = scalar_select %p32, 0, %s31
    %s34 = ssub.s32 %s14, %s33
    %s35 = ssub.s32 %s15, %s29
    %s36 = sor.u32 %s34, %s35
    %s37 = ssub.s32 %s16, %s25
    %s38 = sor.u32 %s36, %s37
    %p39 = scmp.eq.s32.totalorder %s38, 0
    %s41 = sadd.s32 %s40, 1
    %s42 = scalar_select %p39, %s40, %s41
    %p45 = pneg %p39
    %p46 = scmp.eq.s32.totalorder %s7, 1
    %p47 = por %p45, %p46
    %p48 = scmp.ne.s32.totalorder %s40, %s43
    %p49 = scmp.eq.s32.totalorder %s7, 0
    %p50 = por %p48, %p49
    %p51 = scmp.ne.s32.totalorder %s40, %s43
    %p52 = scmp.eq.s32.totalorder %s12, 1
    %p53 = por %p51, %p52
    %p54 = scmp.ne.s32.totalorder %s43, %s44
    %p55 = scmp.eq.s32.totalorder %s12, 0
    %p56 = por %p54, %p55
    %p57 = scmp.ne.s32.totalorder %s43, %s44
    %p58 = scmp.eq.s32.totalorder %s13, 1
    %p59 = por %p57, %p58
    %p61 = scmp.ne.s32.totalorder %s44, %s60
    %p62 = scmp.eq.s32.totalorder %s13, 0
    %p63 = por %p61, %p62
    %s64 = ssub.s32 %s14, %s33
    %s65 = ssub.s32 %s15, %s29
    %s66 = sor.u32 %s64, %s65
    %s67 = ssub.s32 %s16, %s25
    %s68 = sor.u32 %s66, %s67
    %p69 = scmp.eq.s32.totalorder %s68, 0
    %s71 = sadd.s32 %s70, 1
    %s72 = scalar_select %p69, %s70, %s71
    %p75 = pneg %p69
    %p76 = scmp.eq.s32.totalorder %s7, 1
    %p77 = por %p75, %p76
    %p78 = scmp.ne.s32.totalorder %s70, %s73
    %p79 = scmp.eq.s32.totalorder %s7, 0
    %p80 = por %p78, %p79
    %p81 = scmp.ne.s32.totalorder %s70, %s73
    %p82 = scmp.eq.s32.totalorder %s12, 1
    %p83 = por %p81, %p82
    %p84 = scmp.ne.s32.totalorder %s73, %s74
    %p85 = scmp.eq.s32.totalorder %s12, 0
    %p86 = por %p84, %p85
    %p87 = scmp.ne.s32.totalorder %s73, %s74
    %p88 = scmp.eq.s32.totalorder %s13, 1
    %p89 = por %p87, %p88
    %p91 = scmp.ne.s32.totalorder %s74, %s90
    %p92 = scmp.eq.s32.totalorder %s13, 0
    %p93 = por %p91, %p92
    %p94 = scmp.le.s32.totalorder 1, %s7
    %p95 = scmp.lt.s32.totalorder %s7, 3
    %p96 = pnand %p94, %p95
    %p97 = pneg %p96
    // Predicated region
    $region9: #{permutation_block.1} parent=5 // pred_check
      _
    $region10: #{permutation_block.1} parent=5 // pred_check_branch
      %99 = sbr.rel (%p96) target = $region12
    $region11: #{permutation_block.1} parent=5 // pred_region
      %s100 = ssub.s32 %s7, 1
    $region12: #{permutation_block.1} parent=5 // pred_fallthru
      _
    %p101 = scmp.lt.s32.totalorder %s7, 2
    // Predicated region
    $region13: #{permutation_block.1} parent=5 // pred_check
      %p102 = pneg %p101
    $region14: #{permutation_block.1} parent=5 // pred_check_branch
      %104 = sbr.rel (%p102) target = $region16
    $region15: #{permutation_block.1} parent=5 // pred_region
      // Predicated region
      $region17: #{permutation_block.1} parent=15 // pred_check
        %p105 = pneg %p50
      $region18: #{permutation_block.1} parent=15 // pred_check_branch
        %107 = sbr.rel (%p105) target = $region20
      $region19: #{permutation_block.1} parent=15 // pred_region
        %s108 = smul.u32 2, %s16
        %p109 = scmp.lt.s32.totalorder %s14, 1
        %s110 = scalar_select %p109, %s14, 1
        %p111 = scmp.lt.s32.totalorder %s15, 0
        %s112 = scalar_select %p111, %s15, 0
        %p113 = scmp.lt.s32.totalorder %s108, 1
        %s114 = scalar_select %p113, %s108, 1
        %s115 = smul.addr %s112, 2
        %s116 = sadd.s32 %s114, %s115
        %s117 = smul.addr %s110, 4
        %s118 = sadd.s32 %s116, %s117
        %s119 = smul.addr %s118, 2
        %s120 = scalar_lea.vmem %s0, %s119
        %s121 = smul.u32 2, %s16
      $region20: #{permutation_block.1} parent=15 // pred_fallthru
        _
    $region16: #{permutation_block.1} parent=5 // pred_fallthru
      _
    %p122 = scmp.le.s32.totalorder 1, %s7
    %p123 = scmp.lt.s32.totalorder %s7, 3
    %p124 = pnand %p122, %p123
    %p125 = pneg %p124
    // Predicated region
    $region21: #{permutation_block.1} parent=5 // pred_check
      _
    $region22: #{permutation_block.1} parent=5 // pred_check_branch
      %127 = sbr.rel (%p124) target = $region24
    $region23: #{permutation_block.1} parent=5 // pred_region
      %s128 = ssub.s32 %s7, 1
      %s129 = smul.u32 2, %s19
      %p130 = scmp.lt.s32.totalorder %s17, 1
      %s131 = scalar_select %p130, %s17, 1
      %p132 = scmp.lt.s32.totalorder %s18, 0
      %s133 = scalar_select %p132, %s18, 0
      %p134 = scmp.lt.s32.totalorder %s129, 1
      %s135 = scalar_select %p134, %s129, 1
      %s136 = smul.addr %s133, 2
      %s137 = sadd.s32 %s135, %s136
      %s138 = smul.addr %s131, 4
      %s139 = sadd.s32 %s137, %s138
      %s140 = smul.addr %s139, 2
      %s141 = scalar_lea.vmem %s0, %s140
      %p142 = pneg %p56
      %p143 = pneg %p53
      %p144 = pneg %p86
      %p145 = pneg %p83
      %s146 = smul.u32 2, %s18
      %s147 = smul.u32 2, %s19
      %p148 = scmp.lt.s32.totalorder %s17, 1
      %s149 = scalar_select %p148, %s17, 1
      %p150 = scmp.lt.s32.totalorder %s146, 1
      %s151 = scalar_select %p150, %s146, 1
      %p152 = scmp.lt.s32.totalorder %s147, 1
      %s153 = scalar_select %p152, %s147, 1
      %s154 = smul.addr %s151, 2
      %s155 = sadd.s32 %s153, %s154
      %s156 = smul.addr %s149, 4
      %s157 = sadd.s32 %s155, %s156
      %s158 = smul.addr %s157, 2
      %s159 = scalar_lea.vmem %s1, %s158
      %s160 = smul.u32 2, %s19
      %p161 = scmp.lt.s32.totalorder %s17, 1
      %s162 = scalar_select %p161, %s17, 1
      %p163 = scmp.lt.s32.totalorder %s18, 0
      %s164 = scalar_select %p163, %s18, 0
      %p165 = scmp.lt.s32.totalorder %s160, 1
      %s166 = scalar_select %p165, %s160, 1
      %s167 = smul.addr %s164, 2
      %s168 = sadd.s32 %s166, %s167
      %s169 = smul.addr %s162, 4
      %s170 = sadd.s32 %s168, %s169
      %s171 = smul.addr %s170, 2
      %s172 = scalar_lea.vmem %s0, %s171
      %s173 = smul.u32 2, %s19
      %s174 = smul.u32 2, %s18
      %s175 = smul.u32 2, %s19
      %p176 = scmp.lt.s32.totalorder %s17, 1
      %s177 = scalar_select %p176, %s17, 1
      %p178 = scmp.lt.s32.totalorder %s174, 1
      %s179 = scalar_select %p178, %s174, 1
      %p180 = scmp.lt.s32.totalorder %s175, 1
      %s181 = scalar_select %p180, %s175, 1
      %s182 = smul.addr %s179, 2
      %s183 = sadd.s32 %s181, %s182
      %s184 = smul.addr %s177, 4
      %s185 = sadd.s32 %s183, %s184
      %s186 = smul.addr %s185, 2
      %s187 = scalar_lea.vmem %s1, %s186
      %s188 = smul.u32 2, %s18
      %s189 = smul.u32 2, %s19
      %v190 = vld [vmem:[%s172] sm:$0xf]
      %v192 = vrot.slane %v190, 1
      %v193 = vrot.slane %v190, 2
      %v194 = vrot.slane %v190, 3
      %vm195 = vcmask 1040384
      %v196 = vsel %vm195, %v190, %v192
      %vm197 = vcmask 1042434
      %v198 = vsel %vm197, %v193, %v194
      %vm199 = vcmask 1041408
      %v200 = vsel %vm199, %v196, %v198
      %vm201 = vcmask 1041409
      %v202 = vsel %vm201, %v190, %v192
      %vm203 = vcmask 1043459
      %v204 = vsel %vm203, %v193, %v194
      %vm205 = vcmask 1042433
      %v206 = vsel %vm205, %v202, %v204
      %v207 = vrot.slane %v206, 1
      %v210 = vlaneseq
      %vm211 = vcmp.ge.s32.totalorder %v210, 0
      %vm212 = vcmp.lt.s32.totalorder %v210, 256
      %vm213 = vmand %vm211, %vm212
      %214 = vst.msk [vmem:[%s187] ss:$2 sm:$0x3] %vm213, %v200
      %s215 = scalar_lea.vmem %s187, 4
      %216 = vst.msk [vmem:[%s215] ss:$2 sm:$0x3] %vm213, %v207
      %s217 = scalar_lea.vmem %s172, 4
      %v218 = vld [vmem:[%s217] sm:$0xf]
      %v220 = vrot.slane %v218, 1
      %v221 = vrot.slane %v218, 2
      %v222 = vrot.slane %v218, 3
      %v223 = vsel %vm195, %v218, %v220
      %v224 = vsel %vm197, %v221, %v222
      %v225 = vsel %vm199, %v223, %v224
      %v226 = vsel %vm201, %v218, %v220
      %v227 = vsel %vm203, %v221, %v222
      %v228 = vsel %vm205, %v226, %v227
      %v229 = vrot.slane %v228, 1
      %s232 = scalar_lea.vmem %s187, 1
      %233 = vst.msk [vmem:[%s232] ss:$2 sm:$0x3] %vm213, %v225
      %s234 = scalar_lea.vmem %s187, 5
      %235 = vst.msk [vmem:[%s234] ss:$2 sm:$0x3] %vm213, %v229
      %s236 = smul.u32 2, %s18
      %s237 = smul.u32 2, %s19
      %p238 = scmp.lt.s32.totalorder %s17, 1
      %s239 = scalar_select %p238, %s17, 1
      %p240 = scmp.lt.s32.totalorder %s236, 1
      %s241 = scalar_select %p240, %s236, 1
      %p242 = scmp.lt.s32.totalorder %s237, 1
      %s243 = scalar_select %p242, %s237, 1
      %s244 = smul.addr %s241, 2
      %s245 = sadd.s32 %s243, %s244
      %s246 = smul.addr %s239, 4
      %s247 = sadd.s32 %s245, %s246
      %s248 = smul.addr %s247, 2
      %s249 = scalar_lea.vmem %s1, %s248
      // Predicated region
      $region25: #{permutation_block.1} parent=23 // pred_check
        %p250 = pneg %p83
      $region26: #{permutation_block.1} parent=23 // pred_check_branch
        %252 = sbr.rel (%p250) target = $region28
      $region27: #{permutation_block.1} parent=23 // pred_region
        %s253 = smul.u32 2, %s18
        %s254 = smul.u32 2, %s19
      $region28: #{permutation_block.1} parent=23 // pred_fallthru
        _
    $region24: #{permutation_block.1} parent=5 // pred_fallthru
      _
    %p255 = scmp.le.s32.totalorder 2, %s7
    // Predicated region
    $region29: #{permutation_block.1} parent=5 // pred_check
      %p256 = pneg %p255
    $region30: #{permutation_block.1} parent=5 // pred_check_branch
      %258 = sbr.rel (%p256) target = $region32
    $region31: #{permutation_block.1} parent=5 // pred_region
      %s259 = ssub.s32 %s7, 2
      // Predicated region
      $region33: #{permutation_block.1} parent=31 // pred_check
        %p260 = pneg %p89
      $region34: #{permutation_block.1} parent=31 // pred_check_branch
        %262 = sbr.rel (%p260) target = $region36
      $region35: #{permutation_block.1} parent=31 // pred_region
        %s263 = smul.u32 2, %s21
        %s264 = smul.u32 2, %s22
        %p265 = scmp.lt.s32.totalorder %s20, 1
        %s266 = scalar_select %p265, %s20, 1
        %p267 = scmp.lt.s32.totalorder %s263, 1
        %s268 = scalar_select %p267, %s263, 1
        %p269 = scmp.lt.s32.totalorder %s264, 1
        %s270 = scalar_select %p269, %s264, 1
        %s271 = smul.addr %s268, 2
        %s272 = sadd.s32 %s270, %s271
        %s273 = smul.addr %s266, 4
        %s274 = sadd.s32 %s272, %s273
        %s275 = smul.addr %s274, 2
        %s276 = scalar_lea.vmem %s1, %s275
      $region36: #{permutation_block.1} parent=31 // pred_fallthru
        _
    $region32: #{permutation_block.1} parent=5 // pred_fallthru
      _
  $region6: #{permutation_block.1} parent=0 // loop_footer
    %s11 = sadd.s32 1, %s7
  $region7: #{permutation_block.1} parent=0 // loop_footer_branch
    %6 = sbr.rel target = $region3
  $region8: #{permutation_block.1} parent=0 // loop_exit
    _

</llo_original>
